<compile_context>
chip_gen: v5e
topology: v5e:2x2
jax: 0.10.0
libtpu: 0.0.40
codegen_flags: <defaults>
</compile_context>

<pallas_src>
import functools

import jax
import jax.numpy as jnp
from jax.experimental import pallas as pl
from jax.experimental.pallas import tpu as pltpu


def _image_proj_kernel(x_ref, w_ref, b_ref, g_ref, beta_ref, o_ref, acc_ref,
                       *, tile_tokens, cross_dim, eps, out_3d):
    # Grid = (j: output-token-tile axis [parallel], k: contraction axis [arbitrary]).
    #   x_ref:    (Bp, tk)             bf16 activation K-slice
    #   w_ref:    (tk, tt*D)           bf16 or f32 streamed weight tile
    #   b_ref:    (1, tt*D)            f32  bias tile
    #   g_ref:    (1, D)               f32  LayerNorm gamma
    #   beta_ref: (1, D)               f32  LayerNorm beta
    #   o_ref:    (Bp, tt, D) / (Bp, tt*D)  output tile
    #   acc_ref:  (Bp, tt*D)           f32  VMEM accumulator (resident across k)
    k = pl.program_id(1)

    @pl.when(k == 0)
    def _():
        acc_ref[...] = jnp.zeros_like(acc_ref)

    x = x_ref[...]
    w = w_ref[...]
    if w.dtype != x.dtype:
        # Per-tile cast: lets the caller stream an f32-stored weight without a
        # separate whole-weight cast op on every call (VPU work, hidden by DMA).
        w = w.astype(x.dtype)
    acc_ref[...] += jnp.dot(x, w, preferred_element_type=jnp.float32)

    @pl.when(k == pl.num_programs(1) - 1)
    def _():
        y = acc_ref[...] + b_ref[...]
        bm = y.shape[0]
        y3 = y.reshape(bm, tile_tokens, cross_dim)
        # torch.nn.LayerNorm: biased variance, eps inside the sqrt.
        mean = jnp.mean(y3, axis=-1, keepdims=True)
        centered = y3 - mean
        var = jnp.mean(centered * centered, axis=-1, keepdims=True)
        normed = centered * jax.lax.rsqrt(var + eps)
        out = normed * g_ref[...][None, :, :] + beta_ref[...][None, :, :]
        if out_3d:
            o_ref[...] = out.astype(o_ref.dtype)
        else:
            o_ref[...] = out.reshape(bm, tile_tokens * cross_dim).astype(o_ref.dtype)


def _valid_token_tiles(tokens, cross_dim):
    """Divisors tt of `tokens` whose tile width tt*D is lane-aligned (or full), descending."""
    return [tt for tt in range(tokens, 0, -1)
            if tokens % tt == 0 and ((tt * cross_dim) % 128 == 0 or tt == tokens)]


def _largest_aligned_divisor(n, max_val, align=128):
    best = None
    d = align
    lim = min(n, max_val)
    while d <= lim:
        if n % d == 0:
            best = d
        d += align
    return best


def _choose_tiles(tokens, cross_dim, din, w_itemsize, weight_tile_budget):
    """Pick (tt, tk) so the streamed weight tile (tk, tt*D) fits the budget.

    Prefers full-K tiles (no reduction grid axis).  When even a single-token
    full-K column exceeds the budget (SDXL IP-Adapter: din=1280, D=2048 ->
    ~5 MiB/token in bf16), the contraction dim is tiled instead.
    """
    tts = _valid_token_tiles(tokens, cross_dim)
    for tt in tts:                                   # biggest token tile first
        if din * tt * cross_dim * w_itemsize <= weight_tile_budget:
            return tt, din
    tt = tts[-1]                                     # smallest legal token tile
    tn = tt * cross_dim
    if din % 128 == 0:
        max_tk = weight_tile_budget // max(1, tn * w_itemsize)
        tk = _largest_aligned_divisor(din, max_tk) or 128
    else:
        # K-tiling illegal (x block's last dim must be 128-aligned or full);
        # keep full K and let the VMEM limit be raised below.
        tk = din
    return tt, tk


def image_proj_model(image_embeds, proj_w, proj_b, ln_w, ln_b, *,
                     clip_extra_context_tokens, cross_attention_dim,
                     eps=1e-5, out_dtype=jnp.float32,
                     weight_tile_budget_bytes=None):
    """Pallas forward of ImageProjModel.

    image_embeds: (B, clip_embeddings_dim)
    proj_w:       (clip_embeddings_dim, T * D)   -- pass bf16 if possible (hoisted cast);
                                                    f32 is streamed and cast per tile in-kernel.
    proj_b:       (T * D,)
    ln_w, ln_b:   (D,)
    returns:      (B, T, D) in `out_dtype` (default float32)
    """
    B, din = image_embeds.shape
    T = clip_extra_context_tokens
    D = cross_attention_dim
    N = T * D
    assert proj_w.shape == (din, N)
    assert proj_b.shape == (N,) and ln_w.shape == (D,) and ln_b.shape == (D,)

    # Activations are tiny -> bf16 cast in the wrapper is negligible.
    x_bf = image_embeds.astype(jnp.bfloat16)

    # Pad batch to a multiple of 8 sublanes (zero rows, sliced off afterwards).
    Bp = max(8, ((B + 7) // 8) * 8)
    if Bp != B:
        x_bf = jnp.pad(x_bf, ((0, Bp - B), (0, 0)))

    # Generation-specific VMEM / tile budget (v5e/v6e: 128 MiB VMEM -> ~22 MiB
    # weight tiles under a 96 MiB limit; v7x: 64 MiB VMEM -> ~10 MiB tiles).
    try:
        phys_vmem = int(pltpu.get_tpu_info().vmem_capacity_bytes)
    except Exception:
        phys_vmem = 64 << 20                         # conservative (v7x-sized)
    vmem_limit = min(phys_vmem * 3 // 4, 96 << 20)
    w_itemsize = jnp.dtype(proj_w.dtype).itemsize
    out_itemsize = jnp.dtype(out_dtype).itemsize
    if weight_tile_budget_bytes is None:
        # Reserve room for residents / output / accumulator, then split the
        # rest across the weight multi-buffer depth.
        weight_tile_budget_bytes = max(1 << 20, (vmem_limit - (6 << 20)) // 4)

    tt, tk = _choose_tiles(T, D, din, w_itemsize, weight_tile_budget_bytes)
    tn = tt * D
    grid = (N // tn, din // tk)
    total_steps = grid[0] * grid[1]

    # Deeper weight-stream pipelining when there are enough steps to use it.
    w_nbuf = 3 if total_steps >= 3 else 2
    w_spec_kwargs = {"pipeline_mode": pl.Buffered(3)} if w_nbuf == 3 else {}
    w_spec = pl.BlockSpec((tk, tn), lambda j, k: (k, j), **w_spec_kwargs)

    # Store the output directly as (Bp, tt, D) when the block is sublane-legal
    # (tt == T or tt % 8 == 0); otherwise use a lane-dense 2-D slab + wrapper reshape.
    out_3d = (tt == T) or (tt % 8 == 0)
    if out_3d:
        out_shape = jax.ShapeDtypeStruct((Bp, T, D), out_dtype)
        out_spec = pl.BlockSpec((Bp, tt, D), lambda j, k: (0, j, 0))
    else:
        out_shape = jax.ShapeDtypeStruct((Bp, N), out_dtype)
        out_spec = pl.BlockSpec((Bp, tn), lambda j, k: (0, j))

    # Keep the declared VMEM limit consistent with what we will actually use
    # (covers the non-128-aligned-K fallback where the tile can exceed budget).
    est_vmem = (w_nbuf * tk * tn * w_itemsize        # streamed weight buffers
                + 2 * Bp * din * 2                   # x (bf16), double buffered
                + 2 * tn * 4 + 4 * D * 4             # bias + LN params
                + 2 * Bp * tn * out_itemsize         # output buffers
                + Bp * tn * 4)                       # f32 accumulator scratch
    vmem_limit = int(min(phys_vmem, max(vmem_limit, est_vmem + (4 << 20))))

    b2d = proj_b.reshape(1, N).astype(jnp.float32)
    g2d = ln_w.reshape(1, D).astype(jnp.float32)
    beta2d = ln_b.reshape(1, D).astype(jnp.float32)

    kernel = functools.partial(_image_proj_kernel, tile_tokens=tt, cross_dim=D,
                               eps=float(eps), out_3d=out_3d)

    cost = pl.CostEstimate(
        flops=2 * Bp * din * N,
        transcendentals=Bp * T,
        bytes_accessed=(din * N * w_itemsize          # weight (dominant)
                        + grid[0] * Bp * din * 2      # x re-fetched per j tile
                        + Bp * N * out_itemsize       # output
                        + N * 4 + 2 * D * 4))         # bias + LN params

    # TODO(synk): on v7x, pltpu.CORE_PARALLEL on the j axis (or pl.core_map over a
    # 2-TC mesh) would let each TensorCore stream half the weight; kept plain
    # "parallel" here for portability across v5e/v6e/v7x.
    out = pl.pallas_call(
        kernel,
        out_shape=out_shape,
        grid_spec=pltpu.PrefetchScalarGridSpec(
            num_scalar_prefetch=0,
            grid=grid,
            in_specs=[
                pl.BlockSpec((Bp, tk), lambda j, k: (0, k)),   # x K-slice
                w_spec,                                        # streamed weight
                pl.BlockSpec((1, tn), lambda j, k: (0, j)),    # bias tile
                pl.BlockSpec((1, D), lambda j, k: (0, 0)),     # LN gamma
                pl.BlockSpec((1, D), lambda j, k: (0, 0)),     # LN beta
            ],
            out_specs=out_spec,
            scratch_shapes=[pltpu.VMEM((Bp, tn), jnp.float32)],
        ),
        compiler_params=pltpu.CompilerParams(
            dimension_semantics=("parallel", "arbitrary"),
            vmem_limit_bytes=vmem_limit),
        cost_estimate=cost,
    )(x_bf, proj_w, b2d, g2d, beta2d)

    if out_3d:
        return out[:B]
    return out[:B].reshape(B, T, D)


def _reference(image_embeds, proj_w, proj_b, ln_w, ln_b, T, D, eps=1e-5):
    # Same bf16 operand rounding as the kernel; only accumulation order differs.
    x = image_embeds.astype(jnp.bfloat16).astype(jnp.float32)
    w = proj_w.astype(jnp.bfloat16).astype(jnp.float32)
    y = x @ w + proj_b.astype(jnp.float32)
    y = y.reshape(-1, T, D)
    mean = y.mean(-1, keepdims=True)
    var = ((y - mean) ** 2).mean(-1, keepdims=True)
    return (y - mean) / jnp.sqrt(var + eps) * ln_w + ln_b


def _make_inputs(key, B, din, T, D):
    k_x, k_w, k_b, k_g, k_beta = jax.random.split(key, 5)
    x = jax.random.normal(k_x, (B, din), jnp.float32)
    w = jax.random.normal(k_w, (din, T * D), jnp.float32) / jnp.sqrt(din)
    b = 0.02 * jax.random.normal(k_b, (T * D,), jnp.float32)
    g = 1.0 + 0.1 * jax.random.normal(k_g, (D,), jnp.float32)
    beta = 0.1 * jax.random.normal(k_beta, (D,), jnp.float32)
    return x, w, b, g, beta


if __name__ == "__main__":
    key = jax.random.PRNGKey(0)
    k1, k2 = jax.random.split(key)

    # ---- Test 1: small module-consistent shapes, bf16 weight (cast hoisted once,
    #              as a caller storing the projection in bf16 would do). ----
    B, din, D, T = 2, 32, 32, 4
    x, w, b, g, beta = _make_inputs(k1, B, din, T, D)
    w_bf16 = w.astype(jnp.bfloat16)          # hoisted, one-time cast
    out1 = image_proj_model(x, w_bf16, b, g, beta,
                            clip_extra_context_tokens=T,
                            cross_attention_dim=D)
    out1 = jax.block_until_ready(out1)
    ref1 = _reference(x, w, b, g, beta, T, D)
    assert out1.shape == (B, T, D)
    assert jnp.allclose(out1, ref1, atol=2e-3, rtol=2e-3)

    # ---- Test 2: forces the K-tiled accumulator path (tiny weight-tile budget),
    #              f32 weight streamed + cast per tile in-kernel, multi-step grid
    #              with 3-deep weight buffering. ----
    B2, din2, D2, T2 = 3, 256, 128, 8
    x2, w2, b2, g2, beta2 = _make_inputs(k2, B2, din2, T2, D2)
    out2 = image_proj_model(x2, w2, b2, g2, beta2,
                            clip_extra_context_tokens=T2,
                            cross_attention_dim=D2,
                            weight_tile_budget_bytes=128 * 128 * 2)
    out2 = jax.block_until_ready(out2)
    ref2 = _reference(x2, w2, b2, g2, beta2, T2, D2)
    assert out2.shape == (B2, T2, D2)
    assert jnp.allclose(out2, ref2, atol=2e-3, rtol=2e-3)

    print("KERNEL_OK")
</pallas_src>

<mosaic_0001>
module attributes {stable_mosaic.version = 11 : i64} {
  func.func @_image_proj_kernel(%arg0: i32, %arg1: i32, %arg2: memref<8x32xbf16, #tpu.memory_space<vmem>>, %arg3: memref<32x128xbf16, #tpu.memory_space<vmem>>, %arg4: memref<1x128xf32, #tpu.memory_space<vmem>>, %arg5: memref<1x32xf32, #tpu.memory_space<vmem>>, %arg6: memref<1x32xf32, #tpu.memory_space<vmem>>, %arg7: memref<8x4x32xf32, #tpu.memory_space<vmem>>, %arg8: memref<8x128xf32, #tpu.memory_space<vmem>>) attributes {dimension_semantics = [#tpu.dimension_semantics<parallel>, #tpu.dimension_semantics<arbitrary>], iteration_bounds = array<i64: 1, 1>, scalar_prefetch = 0 : i64, scratch_operands = 1 : i64, tpu.core_type = #tpu.core_type<tc>, window_params = [{transform_indices = @transform_0, window_bounds = array<i64: 8, 32>}, {transform_indices = @transform_1, window_bounds = array<i64: 32, 128>}, {transform_indices = @transform_2, window_bounds = array<i64: 1, 128>}, {pipeline_mode = #tpu.pipeline_mode<synchronous>, transform_indices = @transform_3, window_bounds = array<i64: 1, 32>}, {pipeline_mode = #tpu.pipeline_mode<synchronous>, transform_indices = @transform_4, window_bounds = array<i64: 1, 32>}, {transform_indices = @transform_5, window_bounds = array<i64: 8, 4, 32>}]} {
    %c0_i32 = arith.constant 0 : i32
    %0 = arith.cmpi eq, %arg1, %c0_i32 : i32
    %1 = arith.extui %0 : i1 to i32
    %c0_i32_0 = arith.constant 0 : i32
    %2 = arith.cmpi ne, %1, %c0_i32_0 : i32
    scf.if %2 {
      %cst_10 = arith.constant 0.000000e+00 : f32
      %12 = vector.broadcast %cst_10 : f32 to vector<8x128xf32>
      %c0_11 = arith.constant 0 : index
      %c0_12 = arith.constant 0 : index
      %13 = vector.load %arg8[%c0_11, %c0_12] : memref<8x128xf32, #tpu.memory_space<vmem>>, vector<8x128xf32>
      tpu.vector_store %arg8[%c0_11, %c0_12], %12 {strides = array<i32>} : memref<8x128xf32, #tpu.memory_space<vmem>>, vector<8x128xf32>,
    } else {
    }
    %c0 = arith.constant 0 : index
    %c0_1 = arith.constant 0 : index
    %3 = vector.load %arg2[%c0, %c0_1] : memref<8x32xbf16, #tpu.memory_space<vmem>>, vector<8x32xbf16>
    %c0_2 = arith.constant 0 : index
    %c0_3 = arith.constant 0 : index
    %4 = vector.load %arg3[%c0_2, %c0_3] : memref<32x128xbf16, #tpu.memory_space<vmem>>, vector<32x128xbf16>
    %c0_4 = arith.constant 0 : index
    %c0_5 = arith.constant 0 : index
    %5 = vector.load %arg8[%c0_4, %c0_5] : memref<8x128xf32, #tpu.memory_space<vmem>>, vector<8x128xf32>
    %cst = arith.constant dense<0.000000e+00> : vector<8x128xf32>
    %6 = tpu.matmul %3, %4, %cst {dimension_numbers = #tpu.dot_dimension_numbers<[1], [0], [0], [1], [0, 0, 1, 1], [], []>} : vector<8x32xbf16>, vector<32x128xbf16>, vector<8x128xf32> -> vector<8x128xf32>
    %7 = arith.addf %5, %6 : vector<8x128xf32>
    %c0_6 = arith.constant 0 : index
    %c0_7 = arith.constant 0 : index
    %8 = vector.load %arg8[%c0_6, %c0_7] : memref<8x128xf32, #tpu.memory_space<vmem>>, vector<8x128xf32>
    tpu.vector_store %arg8[%c0_6, %c0_7], %7 {strides = array<i32>} : memref<8x128xf32, #tpu.memory_space<vmem>>, vector<8x128xf32>,
    %c0_i32_8 = arith.constant 0 : i32
    %9 = arith.cmpi eq, %arg1, %c0_i32_8 : i32
    %10 = arith.extui %9 : i1 to i32
    %c0_i32_9 = arith.constant 0 : i32
    %11 = arith.cmpi ne, %10, %c0_i32_9 : i32
    scf.if %11 {
      %c0_10 = arith.constant 0 : index
      %c0_11 = arith.constant 0 : index
      %12 = vector.load %arg8[%c0_10, %c0_11] : memref<8x128xf32, #tpu.memory_space<vmem>>, vector<8x128xf32>
      %c0_12 = arith.constant 0 : index
      %c0_13 = arith.constant 0 : index
      %13 = vector.load %arg4[%c0_12, %c0_13] : memref<1x128xf32, #tpu.memory_space<vmem>>, vector<1x128xf32>
      %14 = vector.broadcast %13 : vector<1x128xf32> to vector<8x128xf32>
      %15 = arith.addf %12, %14 : vector<8x128xf32>
      %16 = vector.shape_cast %15 : vector<8x128xf32> to vector<8x4x32xf32>
      %cst_14 = arith.constant dense<0.000000e+00> : vector<8x4xf32>
      %17 = vector.multi_reduction <add>, %16, %cst_14 [2] : vector<8x4x32xf32> to vector<8x4xf32>
      %18 = vector.shape_cast %17 : vector<8x4xf32> to vector<8x4x1xf32>
      %cst_15 = arith.constant 3.200000e+01 : f32
      %19 = vector.broadcast %cst_15 : f32 to vector<8x4x1xf32>
      %20 = arith.divf %18, %19 : vector<8x4x1xf32>
      %21 = vector.broadcast %20 : vector<8x4x1xf32> to vector<8x4x32xf32>
      %22 = arith.subf %16, %21 : vector<8x4x32xf32>
      %23 = arith.mulf %22, %22 : vector<8x4x32xf32>
      %cst_16 = arith.constant dense<0.000000e+00> : vector<8x4xf32>
      %24 = vector.multi_reduction <add>, %23, %cst_16 [2] : vector<8x4x32xf32> to vector<8x4xf32>
      %25 = vector.shape_cast %24 : vector<8x4xf32> to vector<8x4x1xf32>
      %cst_17 = arith.constant 3.200000e+01 : f32
      %26 = vector.broadcast %cst_17 : f32 to vector<8x4x1xf32>
      %27 = arith.divf %25, %26 : vector<8x4x1xf32>
      %cst_18 = arith.constant 9.99999974E-6 : f32
      %28 = vector.broadcast %cst_18 : f32 to vector<8x4x1xf32>
      %29 = arith.addf %27, %28 : vector<8x4x1xf32>
      %30 = math.rsqrt %29 : vector<8x4x1xf32>
      %31 = vector.broadcast %30 : vector<8x4x1xf32> to vector<8x4x32xf32>
      %32 = arith.mulf %22, %31 : vector<8x4x32xf32>
      %c0_19 = arith.constant 0 : index
      %c0_20 = arith.constant 0 : index
      %33 = vector.load %arg5[%c0_19, %c0_20] : memref<1x32xf32, #tpu.memory_space<vmem>>, vector<1x32xf32>
      %34 = vector.shape_cast %33 : vector<1x32xf32> to vector<1x1x32xf32>
      %35 = vector.broadcast %34 : vector<1x1x32xf32> to vector<8x4x32xf32>
      %36 = arith.mulf %32, %35 : vector<8x4x32xf32>
      %c0_21 = arith.constant 0 : index
      %c0_22 = arith.constant 0 : index
      %37 = vector.load %arg6[%c0_21, %c0_22] : memref<1x32xf32, #tpu.memory_space<vmem>>, vector<1x32xf32>
      %38 = vector.shape_cast %37 : vector<1x32xf32> to vector<1x1x32xf32>
      %39 = vector.broadcast %38 : vector<1x1x32xf32> to vector<8x4x32xf32>
      %40 = arith.addf %36, %39 : vector<8x4x32xf32>
      %c0_23 = arith.constant 0 : index
      %c0_24 = arith.constant 0 : index
      %c0_25 = arith.constant 0 : index
      %41 = vector.load %arg7[%c0_23, %c0_24, %c0_25] : memref<8x4x32xf32, #tpu.memory_space<vmem>>, vector<8x4x32xf32>
      tpu.vector_store %arg7[%c0_23, %c0_24, %c0_25], %40 {strides = array<i32>} : memref<8x4x32xf32, #tpu.memory_space<vmem>>, vector<8x4x32xf32>,
    } else {
    }
    return
  }
  func.func @transform_0(%arg0: i32, %arg1: i32) -> (i32, i32) {
    %c0_i32 = arith.constant 0 : i32
    %c0_i32_0 = arith.constant 0 : i32
    return %c0_i32, %arg1 : i32, i32
  }
  func.func @transform_1(%arg0: i32, %arg1: i32) -> (i32, i32) {
    %c0_i32 = arith.constant 0 : i32
    return %arg1, %arg0 : i32, i32
  }
  func.func @transform_2(%arg0: i32, %arg1: i32) -> (i32, i32) {
    %c0_i32 = arith.constant 0 : i32
    %c0_i32_0 = arith.constant 0 : i32
    return %c0_i32, %arg0 : i32, i32
  }
  func.func @transform_3(%arg0: i32, %arg1: i32) -> (i32, i32) {
    %c0_i32 = arith.constant 0 : i32
    %c0_i32_0 = arith.constant 0 : i32
    %c0_i32_1 = arith.constant 0 : i32
    return %c0_i32, %c0_i32_0 : i32, i32
  }
  func.func @transform_4(%arg0: i32, %arg1: i32) -> (i32, i32) {
    %c0_i32 = arith.constant 0 : i32
    %c0_i32_0 = arith.constant 0 : i32
    %c0_i32_1 = arith.constant 0 : i32
    return %c0_i32, %c0_i32_0 : i32, i32
  }
  func.func @transform_5(%arg0: i32, %arg1: i32) -> (i32, i32, i32) {
    %c0_i32 = arith.constant 0 : i32
    %c0_i32_0 = arith.constant 0 : i32
    %c0_i32_1 = arith.constant 0 : i32
    return %c0_i32, %arg0, %c0_i32_0 : i32, i32, i32
  }
}

</mosaic_0001>

<llo_original>
// kernel: tpu_custom_call.1
$region0: #{tpu_custom_call.1}
  #allocation0 [shape = 'u32[]', space=smem, size = 0x4, offset = 0x4, fixed_abs, tag = 'smem constant byte address 0x4 - core index']
  #allocation1 [shape = 'u32[72,128]{1,0:T(1,128)}', space=vmem, size = 0x9000, scoped, tag = 'internal scratch']
  #allocation2 [shape = 'f32[8,128]{1,0:T(8,128)}', space=vmem, size = 0x1000, scoped, tag = 'scratch operand']
  %s0 = inlined_call_operand.hbm [shape: bf16[8,32], index: 0, kind: input, shape index: {}]
  %s1 = inlined_call_operand.hbm [shape: bf16[32,128], index: 1, kind: input, shape index: {}]
  %s2 = inlined_call_operand.vmem [shape: f32[1,128], index: 2, kind: input, shape index: {}]
  %s3 = inlined_call_operand.vmem [shape: f32[1,32], index: 3, kind: input, shape index: {}]
  %s4 = inlined_call_operand.vmem [shape: f32[1,32], index: 4, kind: input, shape index: {}]
  %s5 = inlined_call_operand.hbm [shape: f32[8,4,32], index: 5, kind: output, shape index: {}]
  %s6 = sld [smem:[#allocation0]]
  $region46: #{tpu_custom_call.1} parent=0
    _
  %s8 = ssub.s32 1, %s6
  %s9 = scalar_select 0, %s8, %s6
  $region1: #{tpu_custom_call.1} parent=0
    #allocation3 [shape = 'u8[2048]{0}', space=vmem, size = 0x800, scoped, tag = 'input window, operand 0, single buffered']
    #allocation4 [shape = 's32[1]{0}', space=sflag, size = 0x4, scoped, tag = 'scoped memory for tpu_custom_call.1']
    #allocation5 [shape = 's32[1]{0}', space=sflag, size = 0x4, scoped, tag = 'scoped memory for tpu_custom_call.1']
    #allocation6 [shape = 'u8[8192]{0}', space=vmem, size = 0x2000, scoped, tag = 'input window, operand 1, single buffered']
    #allocation7 [shape = 's32[1]{0}', space=sflag, size = 0x4, scoped, tag = 'scoped memory for tpu_custom_call.1']
    #allocation8 [shape = 'u8[16384]{0}', space=vmem, size = 0x4000, scoped, tag = 'output window, operand 0, single buffered']
    %10 = vsyncpa [#allocation4], 0
    %11 = vsyncpa [#allocation7], 0
    %12 = vsyncpa [#allocation5], 0
    // Predicated region
    $region2: #{tpu_custom_call.1} parent=1 // pred_check
      _
    $region3: #{tpu_custom_call.1} parent=1 // pred_check_branch
      %14 = sbr.rel (0) target = $region5
    $region4: #{tpu_custom_call.1} parent=1 // pred_region
      %16 = vsyncadd [#allocation4], 0
      %s18 = sshll.u32 %s0, 4
      %s19 = int_to_ptr.hbm [resolvable:$true] %s18
      %s20 = sshll.u32 [#allocation3], 4
      %s21 = int_to_ptr.vmem [resolvable:$true] %s20
      %23 = dma.hbm_to_vmem [thread:$0]  %s19, 64, %s21, [#allocation4]
    $region5: #{tpu_custom_call.1} parent=1 // pred_fallthru
      _
    // Predicated region
    $region6: #{tpu_custom_call.1} parent=1 // pred_check
      _
    $region7: #{tpu_custom_call.1} parent=1 // pred_check_branch
      %25 = sbr.rel (0) target = $region9
    $region8: #{tpu_custom_call.1} parent=1 // pred_region
      %27 = vsyncadd [#allocation7], 0
      %s28 = sshll.u32 %s1, 4
      %s29 = int_to_ptr.hbm [resolvable:$true] %s28
      %s30 = sshll.u32 [#allocation6], 4
      %s31 = int_to_ptr.vmem [resolvable:$true] %s30
      %36 = dma.hbm_to_vmem [thread:$0]  %s29, 256, %s31, [#allocation7], 64, 64, 4
    $region9: #{tpu_custom_call.1} parent=1 // pred_fallthru
      _
    // Predicated region
    $region10: #{tpu_custom_call.1} parent=1 // pred_check
      _
    $region11: #{tpu_custom_call.1} parent=1 // pred_check_branch
      %38 = sbr.rel (0) target = $region13
    $region12: #{tpu_custom_call.1} parent=1 // pred_region
      _
    $region13: #{tpu_custom_call.1} parent=1 // pred_fallthru
      _
    // Predicated region
    $region14: #{tpu_custom_call.1} parent=1 // pred_check
      _
    $region15: #{tpu_custom_call.1} parent=1 // pred_check_branch
      %40 = sbr.rel (0) target = $region17
    $region16: #{tpu_custom_call.1} parent=1 // pred_region
      _
    $region17: #{tpu_custom_call.1} parent=1 // pred_fallthru
      _
    // Predicated region
    $region18: #{tpu_custom_call.1} parent=1 // pred_check
      _
    $region19: #{tpu_custom_call.1} parent=1 // pred_check_branch
      %42 = sbr.rel (0) target = $region21
    $region20: #{tpu_custom_call.1} parent=1 // pred_region
      _
    $region21: #{tpu_custom_call.1} parent=1 // pred_fallthru
      _
    // Predicated region
    $region22: #{tpu_custom_call.1} parent=1 // pred_check
      _
    $region23: #{tpu_custom_call.1} parent=1 // pred_check_branch
      %44 = sbr.rel (0) target = $region25
    $region24: #{tpu_custom_call.1} parent=1 // pred_region
      %46 = dma.done [#allocation4], 64
    $region25: #{tpu_custom_call.1} parent=1 // pred_fallthru
      _
    // Predicated region
    $region26: #{tpu_custom_call.1} parent=1 // pred_check
      _
    $region27: #{tpu_custom_call.1} parent=1 // pred_check_branch
      %48 = sbr.rel (0) target = $region29
    $region28: #{tpu_custom_call.1} parent=1 // pred_region
      %50 = dma.done [#allocation7], 256
    $region29: #{tpu_custom_call.1} parent=1 // pred_fallthru
      _
    %p52 = scmp.eq.s32.totalorder 0, 0
    // Predicated region
    $region30: #{tpu_custom_call.1} parent=1 // pred_check
      %p53 = pneg %p52
    $region31: #{tpu_custom_call.1} parent=1 // pred_check_branch
      %55 = sbr.rel (%p53) target = $region33
    $region32: #{tpu_custom_call.1} parent=1 // pred_region
      %56 = vst [vmem:[#allocation2] sm:$0xff] 0.0
    $region33: #{tpu_custom_call.1} parent=1 // pred_fallthru
      _
    %v57 = vld [vmem:[#allocation3] sm:$0xf]
    %v58 = vld [vmem:[#allocation6] sm:$0xf]
    %v59 = vld [vmem:[#allocation6 + $0x4] sm:$0xf]
    %v60 = vld [vmem:[#allocation6 + $0x8] sm:$0xf]
    %v61 = vld [vmem:[#allocation6 + $0xc] sm:$0xf]
    %v62 = vld [vmem:[#allocation2] sm:$0xff]
    %v67 = vunpack.c.l.b16 %v58
    %v68 = vunpack.c.l.b16 %v59
    %v69 = vunpack.c.l.b16 %v60
    %v70 = vunpack.c.l.b16 %v61
    %v71 = vpack.c.b16 %v68, %v67
    %v72 = vpack.c.b16 %v70, %v69
    %vm75 = vcmask 261120
    %v77 = vsel %vm75, %v57, 0
    %79 = vmatpush.bf16.msra.mxu0 0
    %80 = vmatpush.bf16.msra.mxu0 0
    %81 = vmatpush.bf16.msra.mxu0 0
    %82 = vmatpush.bf16.msra.mxu0 0
    %83 = vmatpush.bf16.msra.mxu0 0
    %84 = vmatpush.bf16.msra.mxu0 0
    %85 = vmatpush.bf16.msra.mxu0 %v72
    %86 = vmatpush.bf16.msra.mxu0 %v71
    %87 = vmatmul.bf16.gmra.mxu0 %v77
    %v88 = vpop.f32.mrf.mxu0
    %v89 = vadd.f32 0.0, %v88
    %v90 = vpop.f32.mrf.mxu0
    %91 = vdwg.mxu0
    %v92 = vadd.f32 %v62, %v89
    %93 = vst [vmem:[#allocation2] sm:$0xff] %v92
    // Predicated region
    $region34: #{tpu_custom_call.1} parent=1 // pred_check
      %p94 = pneg %p52
    $region35: #{tpu_custom_call.1} parent=1 // pred_check_branch
      %96 = sbr.rel (%p94) target = $region37
    $region36: #{tpu_custom_call.1} parent=1 // pred_region
      %v97 = vld [vmem:[#allocation2] sm:$0xff]
      %v98 = vld [vmem:[%s2] sm:$0x1]
      %v100 = vperm.slane %v98, 0
      %v102 = vadd.f32 %v97, %v100
      %104 = vrot.lane.b32.xlu0 %v102, 96
      %v105 = vpop.permute.xlu0 %104
      %107 = vrot.lane.b32.xlu0 %v102, 64
      %v108 = vpop.permute.xlu0 %107
      %110 = vrot.lane.b32.xlu0 %v102, 32
      %v111 = vpop.permute.xlu0 %110
      %v113 = vrot.slane %v108, 4
      %vm114 = vcmask 1047556
      %v115 = vsel %vm114, %v113, %v102
      %v116 = vrot.slane %v102, 4
      %v117 = vsel %vm114, %v108, %v116
      %v119 = vunpack.c.l.s4 1983009808
      %v120 = vunpack.c.0.s8 %v119
      %v121 = vperm.slane %v115, %v120
      %v123 = vunpack.c.l.s4 1983009808
      %v124 = vunpack.c.0.s8 %v123
      %v125 = vperm.slane %v117, %v124
      %v126 = vrot.slane %v111, 4
      %v127 = vsel %vm114, %v126, %v105
      %v128 = vrot.slane %v105, 4
      %v129 = vsel %vm114, %v111, %v128
      %v131 = vunpack.c.l.s4 1983009808
      %v132 = vunpack.c.0.s8 %v131
      %v133 = vperm.slane %v127, %v132
      %v135 = vunpack.c.l.s4 1983009808
      %v136 = vunpack.c.0.s8 %v135
      %v137 = vperm.slane %v129, %v136
      %v138 = vrot.slane %v133, 4
      %v139 = vsel %vm114, %v138, %v121
      %v140 = vrot.slane %v121, 4
      %v141 = vsel %vm114, %v133, %v140
      %v143 = vunpack.c.l.s4 1934713408
      %v144 = vunpack.c.0.s8 %v143
      %v145 = vperm.slane %v139, %v144
      %v147 = vunpack.c.l.s4 1934713408
      %v148 = vunpack.c.0.s8 %v147
      %v149 = vperm.slane %v141, %v148
      %v150 = vrot.slane %v137, 4
      %v151 = vsel %vm114, %v150, %v125
      %v152 = vrot.slane %v125, 4
      %v153 = vsel %vm114, %v137, %v152
      %v155 = vunpack.c.l.s4 1934713408
      %v156 = vunpack.c.0.s8 %v155
      %v157 = vperm.slane %v151, %v156
      %v159 = vunpack.c.l.s4 1934713408
      %v160 = vunpack.c.0.s8 %v159
      %v161 = vperm.slane %v153, %v160
      %v162 = vrot.slane %v145, 4
      %v163 = vsel %vm114, 0.0, %v162
      %v164 = vrot.slane %v149, 4
      %v165 = vsel %vm114, 0.0, %v164
      %v166 = vrot.slane %v157, 4
      %v167 = vsel %vm114, 0.0, %v166
      %v168 = vrot.slane %v161, 4
      %v169 = vsel %vm114, 0.0, %v168
      %vm170 = vcmask 257024
      %v171 = vsel %vm170, %v145, 0.0
      %172 = vadd.xlane.f32.xlu0 %v171
      %v173 = vpop.xlane.xlu0 %172
      %v174 = vsel %vm170, %v163, 0.0
      %175 = vadd.xlane.f32.xlu0 %v174
      %v176 = vpop.xlane.xlu0 %175
      %v177 = vsel %vm170, %v149, 0.0
      %178 = vadd.xlane.f32.xlu0 %v177
      %v179 = vpop.xlane.xlu0 %178
      %v180 = vsel %vm170, %v165, 0.0
      %181 = vadd.xlane.f32.xlu0 %v180
      %v182 = vpop.xlane.xlu0 %181
      %v183 = vsel %vm170, %v157, 0.0
      %184 = vadd.xlane.f32.xlu0 %v183
      %v185 = vpop.xlane.xlu0 %184
      %v186 = vsel %vm170, %v167, 0.0
      %187 = vadd.xlane.f32.xlu0 %v186
      %v188 = vpop.xlane.xlu0 %187
      %v189 = vsel %vm170, %v161, 0.0
      %190 = vadd.xlane.f32.xlu0 %v189
      %v191 = vpop.xlane.xlu0 %190
      %v192 = vsel %vm170, %v169, 0.0
      %193 = vadd.xlane.f32.xlu0 %v192
      %v194 = vpop.xlane.xlu0 %193
      %v195 = vrcp.pop 32.0
      %v196 = vmul.f32 32.0, %v195
      %v197 = vsub.f32 1.0, %v196
      %v198 = vmul.f32 %v195, %v197
      %v199 = vadd.f32 %v195, %v198
      %vm200 = vweird.f32 %v195
      %v201 = vsel %vm200, %v195, %v199
      %v202 = vmul.f32 %v173, %v201
      %v203 = vmul.f32 %v176, %v201
      %v204 = vmul.f32 %v179, %v201
      %v205 = vmul.f32 %v182, %v201
      %v206 = vmul.f32 %v185, %v201
      %v207 = vmul.f32 %v188, %v201
      %v208 = vmul.f32 %v191, %v201
      %v209 = vmul.f32 %v194, %v201
      %v210 = vsub.f32 %v145, %v202
      %v211 = vsub.f32 %v163, %v203
      %v212 = vsub.f32 %v149, %v204
      %v213 = vsub.f32 %v165, %v205
      %v214 = vsub.f32 %v157, %v206
      %v215 = vsub.f32 %v167, %v207
      %v216 = vsub.f32 %v161, %v208
      %v217 = vsub.f32 %v169, %v209
      %v218 = vmul.f32 %v210, %v210
      %v219 = vmul.f32 %v211, %v211
      %v220 = vmul.f32 %v212, %v212
      %v221 = vmul.f32 %v213, %v213
      %v222 = vmul.f32 %v214, %v214
      %v223 = vmul.f32 %v215, %v215
      %v224 = vmul.f32 %v216, %v216
      %v225 = vmul.f32 %v217, %v217
      %v226 = vsel %vm170, %v218, 0.0
      %227 = vadd.xlane.f32.xlu0 %v226
      %v228 = vpop.xlane.xlu0 %227
      %v229 = vsel %vm170, %v219, 0.0
      %230 = vadd.xlane.f32.xlu0 %v229
      %v231 = vpop.xlane.xlu0 %230
      %v232 = vsel %vm170, %v220, 0.0
      %233 = vadd.xlane.f32.xlu0 %v232
      %v234 = vpop.xlane.xlu0 %233
      %v235 = vsel %vm170, %v221, 0.0
      %236 = vadd.xlane.f32.xlu0 %v235
      %v237 = vpop.xlane.xlu0 %236
      %v238 = vsel %vm170, %v222, 0.0
      %239 = vadd.xlane.f32.xlu0 %v238
      %v240 = vpop.xlane.xlu0 %239
      %v241 = vsel %vm170, %v223, 0.0
      %242 = vadd.xlane.f32.xlu0 %v241
      %v243 = vpop.xlane.xlu0 %242
      %v244 = vsel %vm170, %v224, 0.0
      %245 = vadd.xlane.f32.xlu0 %v244
      %v246 = vpop.xlane.xlu0 %245
      %v247 = vsel %vm170, %v225, 0.0
      %248 = vadd.xlane.f32.xlu0 %v247
      %v249 = vpop.xlane.xlu0 %248
      %v250 = vmul.f32 %v228, %v201
      %v251 = vmul.f32 %v231, %v201
      %v252 = vmul.f32 %v234, %v201
      %v253 = vmul.f32 %v237, %v201
      %v254 = vmul.f32 %v240, %v201
      %v255 = vmul.f32 %v243, %v201
      %v256 = vmul.f32 %v246, %v201
      %v257 = vmul.f32 %v249, %v201
      %v258 = vadd.f32 %v250, 1e-05
      %v259 = vadd.f32 %v251, 1e-05
      %v260 = vadd.f32 %v252, 1e-05
      %v261 = vadd.f32 %v253, 1e-05
      %v262 = vadd.f32 %v254, 1e-05
      %v263 = vadd.f32 %v255, 1e-05
      %v264 = vadd.f32 %v256, 1e-05
      %v265 = vadd.f32 %v257, 1e-05
      %v266 = vrsqrt.pop %v258
      %v267 = vmul.f32 %v266, %v258
      %v268 = vmul.f32 %v267, %v266
      %v269 = vmul.f32 0.5, %v268
      %v270 = vsub.f32 1.5, %v269
      %v271 = vmul.f32 %v266, %v270
      %vm272 = vweird.f32 %v258
      %vm273 = vweird.f32 %v266
      %vm274 = vmor %vm272, %vm273
      %v275 = vsel %vm274, %v266, %v271
      %v276 = vrsqrt.pop %v259
      %v277 = vmul.f32 %v276, %v259
      %v278 = vmul.f32 %v277, %v276
      %v279 = vmul.f32 0.5, %v278
      %v280 = vsub.f32 1.5, %v279
      %v281 = vmul.f32 %v276, %v280
      %vm282 = vweird.f32 %v259
      %vm283 = vweird.f32 %v276
      %vm284 = vmor %vm282, %vm283
      %v285 = vsel %vm284, %v276, %v281
      %v286 = vrsqrt.pop %v260
      %v287 = vmul.f32 %v286, %v260
      %v288 = vmul.f32 %v287, %v286
      %v289 = vmul.f32 0.5, %v288
      %v290 = vsub.f32 1.5, %v289
      %v291 = vmul.f32 %v286, %v290
      %vm292 = vweird.f32 %v260
      %vm293 = vweird.f32 %v286
      %vm294 = vmor %vm292, %vm293
      %v295 = vsel %vm294, %v286, %v291
      %v296 = vrsqrt.pop %v261
      %v297 = vmul.f32 %v296, %v261
      %v298 = vmul.f32 %v297, %v296
      %v299 = vmul.f32 0.5, %v298
      %v300 = vsub.f32 1.5, %v299
      %v301 = vmul.f32 %v296, %v300
      %vm302 = vweird.f32 %v261
      %vm303 = vweird.f32 %v296
      %vm304 = vmor %vm302, %vm303
      %v305 = vsel %vm304, %v296, %v301
      %v306 = vrsqrt.pop %v262
      %v307 = vmul.f32 %v306, %v262
      %v308 = vmul.f32 %v307, %v306
      %v309 = vmul.f32 0.5, %v308
      %v310 = vsub.f32 1.5, %v309
      %v311 = vmul.f32 %v306, %v310
      %vm312 = vweird.f32 %v262
      %vm313 = vweird.f32 %v306
      %vm314 = vmor %vm312, %vm313
      %v315 = vsel %vm314, %v306, %v311
      %v316 = vrsqrt.pop %v263
      %v317 = vmul.f32 %v316, %v263
      %v318 = vmul.f32 %v317, %v316
      %v319 = vmul.f32 0.5, %v318
      %v320 = vsub.f32 1.5, %v319
      %v321 = vmul.f32 %v316, %v320
      %vm322 = vweird.f32 %v263
      %vm323 = vweird.f32 %v316
      %vm324 = vmor %vm322, %vm323
      %v325 = vsel %vm324, %v316, %v321
      %v326 = vrsqrt.pop %v264
      %v327 = vmul.f32 %v326, %v264
      %v328 = vmul.f32 %v327, %v326
      %v329 = vmul.f32 0.5, %v328
      %v330 = vsub.f32 1.5, %v329
      %v331 = vmul.f32 %v326, %v330
      %vm332 = vweird.f32 %v264
      %vm333 = vweird.f32 %v326
      %vm334 = vmor %vm332, %vm333
      %v335 = vsel %vm334, %v326, %v331
      %v336 = vrsqrt.pop %v265
      %v337 = vmul.f32 %v336, %v265
      %v338 = vmul.f32 %v337, %v336
      %v339 = vmul.f32 0.5, %v338
      %v340 = vsub.f32 1.5, %v339
      %v341 = vmul.f32 %v336, %v340
      %vm342 = vweird.f32 %v265
      %vm343 = vweird.f32 %v336
      %vm344 = vmor %vm342, %vm343
      %v345 = vsel %vm344, %v336, %v341
      %v346 = vmul.f32 %v210, %v275
      %v347 = vmul.f32 %v211, %v285
      %v348 = vmul.f32 %v212, %v295
      %v349 = vmul.f32 %v213, %v305
      %v350 = vmul.f32 %v214, %v315
      %v351 = vmul.f32 %v215, %v325
      %v352 = vmul.f32 %v216, %v335
      %v353 = vmul.f32 %v217, %v345
      %v354 = vld [vmem:[%s3] sm:$0x1]
      %v356 = vperm.slane %v354, 0
      %v358 = vmul.f32 %v346, %v356
      %v359 = vmul.f32 %v347, %v356
      %v360 = vmul.f32 %v348, %v356
      %v361 = vmul.f32 %v349, %v356
      %v362 = vmul.f32 %v350, %v356
      %v363 = vmul.f32 %v351, %v356
      %v364 = vmul.f32 %v352, %v356
      %v365 = vmul.f32 %v353, %v356
      %v366 = vld [vmem:[%s4] sm:$0x1]
      %v368 = vperm.slane %v366, 0
      %v370 = vadd.f32 %v358, %v368
      %v371 = vadd.f32 %v359, %v368
      %v372 = vadd.f32 %v360, %v368
      %v373 = vadd.f32 %v361, %v368
      %v374 = vadd.f32 %v362, %v368
      %v375 = vadd.f32 %v363, %v368
      %v376 = vadd.f32 %v364, %v368
      %v377 = vadd.f32 %v365, %v368
      %378 = vst.msk [vmem:[#allocation8] sm:$0xf] %vm170, %v370
      %379 = vst.msk [vmem:[#allocation8 + $0x4] sm:$0xf] %vm170, %v371
      %380 = vst.msk [vmem:[#allocation8 + $0x8] sm:$0xf] %vm170, %v372
      %381 = vst.msk [vmem:[#allocation8 + $0xc] sm:$0xf] %vm170, %v373
      %382 = vst.msk [vmem:[#allocation8 + $0x10] sm:$0xf] %vm170, %v374
      %383 = vst.msk [vmem:[#allocation8 + $0x14] sm:$0xf] %vm170, %v375
      %384 = vst.msk [vmem:[#allocation8 + $0x18] sm:$0xf] %vm170, %v376
      %385 = vst.msk [vmem:[#allocation8 + $0x1c] sm:$0xf] %vm170, %v377
    $region37: #{tpu_custom_call.1} parent=1 // pred_fallthru
      _
    // Predicated region
    $region38: #{tpu_custom_call.1} parent=1 // pred_check
      _
    $region39: #{tpu_custom_call.1} parent=1 // pred_check_branch
      %387 = sbr.rel (0) target = $region41
    $region40: #{tpu_custom_call.1} parent=1 // pred_region
      %389 = vsyncadd [#allocation5], 0
      %s390 = sshll.u32 [#allocation8], 4
      %s391 = int_to_ptr.vmem [resolvable:$true] %s390
      %s392 = sshll.u32 %s5, 4
      %s393 = int_to_ptr.hbm [resolvable:$true] %s392
      %398 = dma.vmem_to_hbm [thread:$0]  %s391, 512, %s393, [#allocation5], 64, 64, 4
    $region41: #{tpu_custom_call.1} parent=1 // pred_fallthru
      _
    // Predicated region
    $region42: #{tpu_custom_call.1} parent=1 // pred_check
      _
    $region43: #{tpu_custom_call.1} parent=1 // pred_check_branch
      %400 = sbr.rel (0) target = $region45
    $region44: #{tpu_custom_call.1} parent=1 // pred_region
      %402 = dma.done [#allocation5], 512
    $region45: #{tpu_custom_call.1} parent=1 // pred_fallthru
      _
    %403 = vsyncpa [#allocation4], 1
    %404 = vsyncpa [#allocation7], 1
    %405 = vsyncpa [#allocation5], 1

</llo_original>
